<compile_context>
chip_gen: v7x
topology: tpu7x:2x2x1
jax: 0.10.0
libtpu: 0.0.40
codegen_flags: <defaults>
</compile_context>

<pallas_src>
import math

import jax
import jax.numpy as jnp
from jax import lax
from jax.experimental import pallas as pl
from jax.experimental.pallas import tpu as pltpu


# ----------------------------------------------------------------------------
# helpers
# ----------------------------------------------------------------------------
def _round_up(x: int, m: int) -> int:
    return ((x + m - 1) // m) * m


def _clamp_vmem(est_bytes: int) -> int:
    # >= 32 MiB so we beat the scoped defaults, <= 56 MiB so v7x (64 MiB) fits.
    return int(min(max(est_bytes, 32 << 20), 56 << 20))


# ----------------------------------------------------------------------------
# Pallas kernels
# ----------------------------------------------------------------------------
def _make_conv_kernel(tap_offsets, l_out):
    """Stride-1 valid conv on a flattened, VMEM-resident image via the wide
    (garbage-column) trick:  y[:, q] = sum_t  W_t @ x[:, q + off_t].
    Also emits per-channel sum / sum-of-squares partials for BatchNorm."""
    n_taps = len(tap_offsets)

    def kernel(x_ref, w_ref, m_ref, y_ref, s_ref, q_ref):
        acc = None
        for t in range(n_taps):                                   # static unroll
            xs = x_ref[0, :, pl.ds(tap_offsets[t], l_out)]        # (Cin_p, L) bf16
            part = jnp.dot(w_ref[t], xs,                          # MXU, f32 acc
                           preferred_element_type=jnp.float32)
            acc = part if acc is None else acc + part
        acc = acc * m_ref[...]                                    # zero invalid lanes
        y_ref[0] = acc
        s_ref[0] = jnp.sum(acc, axis=1, keepdims=True)            # (Cout_p, 1)
        q_ref[0] = jnp.sum(acc * acc, axis=1, keepdims=True)

    return kernel


def _conv_pallas(x_flat, w_taps, mask, tap_offsets):
    n, cin_p, flat_p = x_flat.shape
    n_taps, cout_p, _ = w_taps.shape
    l_out = mask.shape[1]

    x_b = cin_p * flat_p * 2
    w_b = n_taps * cout_p * cin_p * 2
    y_b = cout_p * l_out * 4
    m_b = l_out * 4
    est = 2 * (x_b + w_b + m_b + y_b + 2 * cout_p * 4) + 2 * y_b + x_b + (2 << 20)

    return pl.pallas_call(
        _make_conv_kernel(tap_offsets, l_out),
        out_shape=(
            jax.ShapeDtypeStruct((n, cout_p, l_out), jnp.float32),  # conv out (wide)
            jax.ShapeDtypeStruct((n, cout_p, 1), jnp.float32),      # per-image sum
            jax.ShapeDtypeStruct((n, cout_p, 1), jnp.float32),      # per-image sumsq
        ),
        grid=(n,),
        in_specs=[
            pl.BlockSpec((1, cin_p, flat_p), lambda i: (i, 0, 0)),       # image
            pl.BlockSpec((n_taps, cout_p, cin_p), lambda i: (0, 0, 0)),  # taps (resident)
            pl.BlockSpec((1, l_out), lambda i: (0, 0)),                  # valid-lane mask
        ],
        out_specs=(
            pl.BlockSpec((1, cout_p, l_out), lambda i: (i, 0, 0)),
            pl.BlockSpec((1, cout_p, 1), lambda i: (i, 0, 0)),
            pl.BlockSpec((1, cout_p, 1), lambda i: (i, 0, 0)),
        ),
        compiler_params=pltpu.CompilerParams(
            dimension_semantics=("parallel",),
            vmem_limit_bytes=_clamp_vmem(est)),
    )(x_flat, w_taps, mask)


def _make_bn_kernel(use_relu):
    def kernel(y_ref, s_ref, b_ref, o_ref):
        out = y_ref[0] * s_ref[...] + b_ref[...]
        if use_relu:
            out = jnp.maximum(out, 0.0)
        o_ref[0] = out.astype(o_ref.dtype)
    return kernel


def _pick_bn_tile(l_out, cout_p, out_itemsize, budget_bytes=24 << 20):
    per_lane = max(1, cout_p * (4 + out_itemsize) * 2)   # dbl-buffered in + out
    cap = max(128, (budget_bytes // per_lane) // 128 * 128)
    tn = min(cap, 8192, l_out)
    tn -= tn % 128
    tn = max(tn, 128)
    while l_out % tn:
        tn -= 128
    return tn


def _bn_pallas(y, scale, shift, use_relu, out_dtype):
    n, cout_p, l_out = y.shape
    itemsize = jnp.dtype(out_dtype).itemsize
    tn = _pick_bn_tile(l_out, cout_p, itemsize)
    est = 2 * cout_p * tn * (4 + itemsize) * 2 + (1 << 20)
    return pl.pallas_call(
        _make_bn_kernel(use_relu),
        out_shape=jax.ShapeDtypeStruct((n, cout_p, l_out), out_dtype),
        grid=(n, l_out // tn),
        in_specs=[
            pl.BlockSpec((1, cout_p, tn), lambda i, j: (i, 0, j)),
            pl.BlockSpec((cout_p, 1), lambda i, j: (0, 0)),
            pl.BlockSpec((cout_p, 1), lambda i, j: (0, 0)),
        ],
        out_specs=pl.BlockSpec((1, cout_p, tn), lambda i, j: (i, 0, j)),
        compiler_params=pltpu.CompilerParams(
            dimension_semantics=("parallel", "parallel"),
            vmem_limit_bytes=_clamp_vmem(est)),
    )(y, scale, shift)


# ----------------------------------------------------------------------------
# ConvReg module (JAX/Pallas)
# ----------------------------------------------------------------------------
class ConvRegPallas:
    """Pallas port of ConvReg: conv (branch chosen from shapes) + BN + ReLU."""

    def __init__(self, s_shape, t_shape, use_relu=True, key=None,
                 dtype=jnp.float32):
        s_N, s_C, s_H, s_W = s_shape
        t_N, t_C, t_H, t_W = t_shape
        self.use_relu = use_relu
        self.eps = 1e-5
        self.s_C, self.t_C = s_C, t_C

        if s_H == 2 * t_H:
            self.mode, self.kh, self.kw, self.stride, self.pad = "conv_s2", 3, 3, 2, 1
            assert s_H % 2 == 0 and s_W % 2 == 0, "stride-2 branch expects even H/W"
        elif s_H * 2 == t_H:
            self.mode, self.kh, self.kw, self.stride, self.pad = "convt", 4, 4, 2, 1
        elif s_H >= t_H:
            self.mode = "conv_s1"
            self.kh, self.kw = 1 + s_H - t_H, 1 + s_W - t_W
            self.stride, self.pad = 1, 0
        else:
            raise NotImplementedError(
                "student size {}, teacher size {}".format(s_H, t_H))

        key = jax.random.PRNGKey(0) if key is None else key
        kw_key, kb_key = jax.random.split(key)
        if self.mode == "convt":
            w_shape = (s_C, t_C, self.kh, self.kw)   # ConvTranspose2d: (Cin, Cout, kh, kw)
        else:
            w_shape = (t_C, s_C, self.kh, self.kw)   # Conv2d: (Cout, Cin, kh, kw)
        bound = 1.0 / math.sqrt(s_C * self.kh * self.kw)
        self.conv_w = jax.random.uniform(kw_key, w_shape, dtype, -bound, bound)
        self.conv_b = jax.random.uniform(kb_key, (t_C,), dtype, -bound, bound)
        self.gamma = jnp.ones((t_C,), jnp.float32)
        self.beta = jnp.zeros((t_C,), jnp.float32)
        self.running_mean = jnp.zeros((t_C,), jnp.float32)
        self.running_var = jnp.ones((t_C,), jnp.float32)

        self._build_effective_weights()

    # ------------------------------------------------------------------
    # Rewrite every branch as ONE stride-1 valid conv:
    #   conv_s2 : 2x2 input-phase decomposition   -> Cin_eff = 4*s_C, k = 2x2
    #   convt   : 4 output phases as out channels -> Cout_eff = 4*t_C, k = 3x3
    #   conv_s1 : already a stride-1 valid conv
    # ------------------------------------------------------------------
    def _build_effective_weights(self):
        w32 = self.conv_w.astype(jnp.float32)
        if self.mode == "conv_s2":
            # y[oy,ox] = sum_{p,q,a,b} W[2a+p, 2b+q] * phase_{p,q}[oy+a, ox+b]
            wp = jnp.pad(w32, ((0, 0), (0, 0), (0, 1), (0, 1)))      # 3x3 -> 4x4
            wp = wp.reshape(self.t_C, self.s_C, 2, 2, 2, 2)          # (co,c,a,p,b,q)
            w_eff = wp.transpose(0, 3, 5, 1, 2, 4).reshape(
                self.t_C, 4 * self.s_C, 2, 2)
            self.keh, self.kew = 2, 2
            self.cin_eff, self.cout_eff = 4 * self.s_C, self.t_C
        elif self.mode == "convt":
            # y[2u+r, 2v+c] = 3x3 stride-1 valid conv of pad(x,1) with a
            # phase-dependent scatter of the transposed-conv taps.
            KR = ((3, 1, None), (None, 2, 0))
            w_eff = jnp.zeros((4 * self.t_C, self.s_C, 3, 3), jnp.float32)
            for r in range(2):
                for c in range(2):
                    p = 2 * r + c
                    for a in range(3):
                        ir = KR[r][a]
                        if ir is None:
                            continue
                        for b in range(3):
                            jc = KR[c][b]
                            if jc is None:
                                continue
                            blk = w32[:, :, ir, jc].T                # (t_C, s_C)
                            w_eff = w_eff.at[
                                p * self.t_C:(p + 1) * self.t_C, :, a, b].set(blk)
            self.keh, self.kew = 3, 3
            self.cin_eff, self.cout_eff = self.s_C, 4 * self.t_C
        else:  # conv_s1
            w_eff = w32
            self.keh, self.kew = self.kh, self.kw
            self.cin_eff, self.cout_eff = self.s_C, self.t_C

        self.cin_p = _round_up(self.cin_eff, 8)
        self.cout_p = _round_up(self.cout_eff, 8)
        w_eff = jnp.pad(w_eff, ((0, self.cout_p - self.cout_eff),
                                (0, self.cin_p - self.cin_eff), (0, 0), (0, 0)))
        # (taps, Cout_p, Cin_p), tap index t = a*kew + b  (bf16 for the MXU)
        self.w_taps = w_eff.transpose(2, 3, 0, 1).reshape(
            self.keh * self.kew, self.cout_p, self.cin_p).astype(jnp.bfloat16)

    def _prepare_input(self, x):
        if self.mode == "conv_s2":
            xp = jnp.pad(x, ((0, 0), (0, 0), (1, 1), (1, 1)))
            phases = [xp[:, :, p::2, q::2] for p in (0, 1) for q in (0, 1)]
            return jnp.concatenate(phases, axis=1)
        if self.mode == "convt":
            return jnp.pad(x, ((0, 0), (0, 0), (1, 1), (1, 1)))
        return x

    def __call__(self, x, training=True):
        n = x.shape[0]
        x_eff = self._prepare_input(x)
        _, _, hp, wp = x_eff.shape
        oh, ow = hp - self.keh + 1, wp - self.kew + 1

        l_out = _round_up(oh * wp, 128)
        flat_need = (self.keh - 1) * wp + (self.kew - 1) + l_out
        flat_p = _round_up(flat_need, 128)

        x_flat = x_eff.reshape(n, self.cin_eff, hp * wp)
        x_flat = jnp.pad(x_flat, ((0, 0), (0, self.cin_p - self.cin_eff),
                                  (0, flat_p - hp * wp))).astype(jnp.bfloat16)

        lane = jnp.arange(l_out, dtype=jnp.int32)
        mask = ((lane < oh * wp) & (lane % wp < ow)).astype(
            jnp.float32).reshape(1, l_out)
        tap_offsets = tuple(a * wp + b
                            for a in range(self.keh) for b in range(self.kew))

        # conv (no bias) as fused shifted matmuls + BN partial sums
        y, psum, psq = _conv_pallas(x_flat, self.w_taps, mask, tap_offsets)

        # ---- BN scale/shift from the fused partials (conv bias folded in) ----
        sum_e = jnp.sum(psum[:, :self.cout_eff, 0], axis=0)
        ssq_e = jnp.sum(psq[:, :self.cout_eff, 0], axis=0)
        if self.mode == "convt":
            sum_t = sum_e.reshape(4, self.t_C).sum(axis=0)
            ssq_t = ssq_e.reshape(4, self.t_C).sum(axis=0)
            count = float(4 * n * oh * ow)
        else:
            sum_t, ssq_t = sum_e, ssq_e
            count = float(n * oh * ow)

        if training:
            mean = sum_t / count
            var = jnp.maximum(ssq_t / count - mean * mean, 0.0)
            scale_t = self.gamma * lax.rsqrt(var + self.eps)
            shift_t = self.beta - mean * scale_t        # conv bias cancels exactly
        else:
            scale_t = self.gamma * lax.rsqrt(self.running_var + self.eps)
            shift_t = self.beta + (self.conv_b.astype(jnp.float32)
                                   - self.running_mean) * scale_t
        # TODO(synk): running_mean/running_var updates (training side effect)
        # are not emitted.

        if self.mode == "convt":
            scale_e, shift_e = jnp.tile(scale_t, 4), jnp.tile(shift_t, 4)
        else:
            scale_e, shift_e = scale_t, shift_t
        scale_p = jnp.pad(scale_e, (0, self.cout_p - self.cout_eff)
                          ).reshape(self.cout_p, 1)
        shift_p = jnp.pad(shift_e, (0, self.cout_p - self.cout_eff)
                          ).reshape(self.cout_p, 1)

        # fused BN + optional ReLU, written directly in (N, C, pixels) layout
        out_w = _bn_pallas(y, scale_p, shift_p, self.use_relu, x.dtype)

        out = out_w[:, :self.cout_eff, :oh * wp].reshape(
            n, self.cout_eff, oh, wp)[:, :, :, :ow]
        if self.mode == "convt":
            out = out.reshape(n, 2, 2, self.t_C, oh, ow).transpose(
                0, 3, 4, 1, 5, 2).reshape(n, self.t_C, 2 * oh, 2 * ow)
        return out


# ----------------------------------------------------------------------------
# pure-JAX reference (mirrors the PyTorch forward; bf16 operands, f32 accum)
# ----------------------------------------------------------------------------
def _ref_forward(model, x, training=True):
    xb = x.astype(jnp.bfloat16)
    wb = model.conv_w.astype(jnp.bfloat16)
    if model.mode == "convt":
        wt = jnp.flip(wb, axis=(2, 3)).transpose(1, 0, 2, 3)
        p = model.kh - 1 - model.pad
        y = lax.conv_general_dilated(
            xb, wt, window_strides=(1, 1), padding=[(p, p), (p, p)],
            lhs_dilation=(model.stride, model.stride),
            dimension_numbers=("NCHW", "OIHW", "NCHW"),
            preferred_element_type=jnp.float32,
            precision=lax.Precision.HIGHEST)
    else:
        y = lax.conv_general_dilated(
            xb, wb, window_strides=(model.stride, model.stride),
            padding=[(model.pad, model.pad), (model.pad, model.pad)],
            dimension_numbers=("NCHW", "OIHW", "NCHW"),
            preferred_element_type=jnp.float32,
            precision=lax.Precision.HIGHEST)
    y = y + model.conv_b.astype(jnp.float32)[None, :, None, None]
    if training:
        mean = y.mean(axis=(0, 2, 3), keepdims=True)
        var = jnp.square(y - mean).mean(axis=(0, 2, 3), keepdims=True)
    else:
        mean = model.running_mean[None, :, None, None]
        var = model.running_var[None, :, None, None]
    out = (y - mean) * lax.rsqrt(var + model.eps)
    out = out * model.gamma[None, :, None, None] + model.beta[None, :, None, None]
    if model.use_relu:
        out = jnp.maximum(out, 0.0)
    return out.astype(x.dtype)


# ----------------------------------------------------------------------------
# smoke test
# ----------------------------------------------------------------------------
if __name__ == "__main__":
    key = jax.random.PRNGKey(0)
    k1, k2, k3, k4, k5, k6 = jax.random.split(key, 6)

    # Case 1: s_H == 2*t_H  ->  Conv2d(k=3, stride=2, padding=1)
    s_shape, t_shape = (2, 4, 16, 16), (2, 8, 8, 8)
    x = jax.random.normal(k1, s_shape, jnp.float32)
    model = ConvRegPallas(s_shape, t_shape, use_relu=True, key=k2)
    out = jax.block_until_ready(model(x))
    ref = _ref_forward(model, x)
    assert out.shape == (2, 8, 8, 8) and out.dtype == x.dtype
    assert jnp.allclose(out, ref, atol=2e-3, rtol=2e-3), "case1 mismatch"

    # Case 2: s_H*2 == t_H  ->  ConvTranspose2d(k=4, stride=2, padding=1)
    s_shape, t_shape = (2, 4, 8, 8), (2, 6, 16, 16)
    x = jax.random.normal(k3, s_shape, jnp.float32)
    model = ConvRegPallas(s_shape, t_shape, use_relu=True, key=k4)
    out = jax.block_until_ready(model(x))
    ref = _ref_forward(model, x)
    assert out.shape == (2, 6, 16, 16)
    assert jnp.allclose(out, ref, atol=2e-3, rtol=2e-3), "case2 mismatch"

    # Case 3: s_H >= t_H  ->  Conv2d(k=(1+dH, 1+dW), stride=1), no ReLU
    s_shape, t_shape = (2, 4, 12, 12), (2, 6, 8, 8)
    x = jax.random.normal(k5, s_shape, jnp.float32)
    model = ConvRegPallas(s_shape, t_shape, use_relu=False, key=k6)
    out = jax.block_until_ready(model(x))
    ref = _ref_forward(model, x)
    assert out.shape == (2, 6, 8, 8)
    assert jnp.allclose(out, ref, atol=2e-3, rtol=2e-3), "case3 mismatch"

    print("KERNEL_OK")
</pallas_src>

<mosaic_0001>
module attributes {stable_mosaic.version = 11 : i64} {
  func.func @kernel(%arg0: i32, %arg1: memref<1x16x256xbf16, #tpu.memory_space<vmem>>, %arg2: memref<4x8x16xbf16, #tpu.memory_space<vmem>>, %arg3: memref<1x128xf32, #tpu.memory_space<vmem>>, %arg4: memref<1x8x128xf32, #tpu.memory_space<vmem>>, %arg5: memref<1x8x1xf32, #tpu.memory_space<vmem>>, %arg6: memref<1x8x1xf32, #tpu.memory_space<vmem>>) attributes {dimension_semantics = [#tpu.dimension_semantics<parallel>], iteration_bounds = array<i64: 2>, scalar_prefetch = 0 : i64, scratch_operands = 0 : i64, tpu.core_type = #tpu.core_type<tc>, window_params = [{transform_indices = @transform_0, window_bounds = array<i64: 1, 16, 256>}, {pipeline_mode = #tpu.pipeline_mode<synchronous>, transform_indices = @transform_1, window_bounds = array<i64: 4, 8, 16>}, {pipeline_mode = #tpu.pipeline_mode<synchronous>, transform_indices = @transform_2, window_bounds = array<i64: 1, 128>}, {transform_indices = @transform_3, window_bounds = array<i64: 1, 8, 128>}, {transform_indices = @transform_4, window_bounds = array<i64: 1, 8, 1>}, {transform_indices = @transform_5, window_bounds = array<i64: 1, 8, 1>}]} {
    %c0 = arith.constant 0 : index
    %c0_0 = arith.constant 0 : index
    %c0_1 = arith.constant 0 : index
    %0 = vector.load %arg1[%c0, %c0_0, %c0_1] : memref<1x16x256xbf16, #tpu.memory_space<vmem>>, vector<1x16x128xbf16>
    %1 = vector.shape_cast %0 : vector<1x16x128xbf16> to vector<16x128xbf16>
    %c0_2 = arith.constant 0 : index
    %c0_3 = arith.constant 0 : index
    %c0_4 = arith.constant 0 : index
    %2 = vector.load %arg2[%c0_2, %c0_3, %c0_4] : memref<4x8x16xbf16, #tpu.memory_space<vmem>>, vector<1x8x16xbf16>
    %3 = vector.shape_cast %2 : vector<1x8x16xbf16> to vector<8x16xbf16>
    %cst = arith.constant dense<0.000000e+00> : vector<8x128xf32>
    %4 = tpu.matmul %3, %1, %cst {dimension_numbers = #tpu.dot_dimension_numbers<[1], [0], [0], [1], [0, 0, 1, 1], [], []>} : vector<8x16xbf16>, vector<16x128xbf16>, vector<8x128xf32> -> vector<8x128xf32>
    %c0_5 = arith.constant 0 : index
    %c0_6 = arith.constant 0 : index
    %c1 = arith.constant 1 : index
    %5 = vector.load %arg1[%c0_5, %c0_6, %c1] : memref<1x16x256xbf16, #tpu.memory_space<vmem>>, vector<1x16x128xbf16>
    %6 = vector.shape_cast %5 : vector<1x16x128xbf16> to vector<16x128xbf16>
    %c1_7 = arith.constant 1 : index
    %c0_8 = arith.constant 0 : index
    %c0_9 = arith.constant 0 : index
    %7 = vector.load %arg2[%c1_7, %c0_8, %c0_9] : memref<4x8x16xbf16, #tpu.memory_space<vmem>>, vector<1x8x16xbf16>
    %8 = vector.shape_cast %7 : vector<1x8x16xbf16> to vector<8x16xbf16>
    %cst_10 = arith.constant dense<0.000000e+00> : vector<8x128xf32>
    %9 = tpu.matmul %8, %6, %cst_10 {dimension_numbers = #tpu.dot_dimension_numbers<[1], [0], [0], [1], [0, 0, 1, 1], [], []>} : vector<8x16xbf16>, vector<16x128xbf16>, vector<8x128xf32> -> vector<8x128xf32>
    %10 = arith.addf %4, %9 : vector<8x128xf32>
    %c0_11 = arith.constant 0 : index
    %c0_12 = arith.constant 0 : index
    %c9 = arith.constant 9 : index
    %11 = vector.load %arg1[%c0_11, %c0_12, %c9] : memref<1x16x256xbf16, #tpu.memory_space<vmem>>, vector<1x16x128xbf16>
    %12 = vector.shape_cast %11 : vector<1x16x128xbf16> to vector<16x128xbf16>
    %c2 = arith.constant 2 : index
    %c0_13 = arith.constant 0 : index
    %c0_14 = arith.constant 0 : index
    %13 = vector.load %arg2[%c2, %c0_13, %c0_14] : memref<4x8x16xbf16, #tpu.memory_space<vmem>>, vector<1x8x16xbf16>
    %14 = vector.shape_cast %13 : vector<1x8x16xbf16> to vector<8x16xbf16>
    %cst_15 = arith.constant dense<0.000000e+00> : vector<8x128xf32>
    %15 = tpu.matmul %14, %12, %cst_15 {dimension_numbers = #tpu.dot_dimension_numbers<[1], [0], [0], [1], [0, 0, 1, 1], [], []>} : vector<8x16xbf16>, vector<16x128xbf16>, vector<8x128xf32> -> vector<8x128xf32>
    %16 = arith.addf %10, %15 : vector<8x128xf32>
    %c0_16 = arith.constant 0 : index
    %c0_17 = arith.constant 0 : index
    %c10 = arith.constant 10 : index
    %17 = vector.load %arg1[%c0_16, %c0_17, %c10] : memref<1x16x256xbf16, #tpu.memory_space<vmem>>, vector<1x16x128xbf16>
    %18 = vector.shape_cast %17 : vector<1x16x128xbf16> to vector<16x128xbf16>
    %c3 = arith.constant 3 : index
    %c0_18 = arith.constant 0 : index
    %c0_19 = arith.constant 0 : index
    %19 = vector.load %arg2[%c3, %c0_18, %c0_19] : memref<4x8x16xbf16, #tpu.memory_space<vmem>>, vector<1x8x16xbf16>
    %20 = vector.shape_cast %19 : vector<1x8x16xbf16> to vector<8x16xbf16>
    %cst_20 = arith.constant dense<0.000000e+00> : vector<8x128xf32>
    %21 = tpu.matmul %20, %18, %cst_20 {dimension_numbers = #tpu.dot_dimension_numbers<[1], [0], [0], [1], [0, 0, 1, 1], [], []>} : vector<8x16xbf16>, vector<16x128xbf16>, vector<8x128xf32> -> vector<8x128xf32>
    %22 = arith.addf %16, %21 : vector<8x128xf32>
    %c0_21 = arith.constant 0 : index
    %c0_22 = arith.constant 0 : index
    %23 = vector.load %arg3[%c0_21, %c0_22] : memref<1x128xf32, #tpu.memory_space<vmem>>, vector<1x128xf32>
    %24 = vector.broadcast %23 : vector<1x128xf32> to vector<8x128xf32>
    %25 = arith.mulf %22, %24 : vector<8x128xf32>
    %c0_23 = arith.constant 0 : index
    %c0_24 = arith.constant 0 : index
    %c0_25 = arith.constant 0 : index
    %26 = vector.load %arg4[%c0_23, %c0_24, %c0_25] : memref<1x8x128xf32, #tpu.memory_space<vmem>>, vector<1x8x128xf32>
    %27 = vector.shape_cast %26 : vector<1x8x128xf32> to vector<8x128xf32>
    %28 = vector.shape_cast %25 : vector<8x128xf32> to vector<1x8x128xf32>
    tpu.vector_store %arg4[%c0_23, %c0_24, %c0_25], %28 {strides = array<i32>} : memref<1x8x128xf32, #tpu.memory_space<vmem>>, vector<1x8x128xf32>,
    %cst_26 = arith.constant dense<0.000000e+00> : vector<8xf32>
    %29 = vector.multi_reduction <add>, %25, %cst_26 [1] : vector<8x128xf32> to vector<8xf32>
    %30 = vector.shape_cast %29 : vector<8xf32> to vector<8x1xf32>
    %c0_27 = arith.constant 0 : index
    %c0_28 = arith.constant 0 : index
    %c0_29 = arith.constant 0 : index
    %31 = vector.load %arg5[%c0_27, %c0_28, %c0_29] : memref<1x8x1xf32, #tpu.memory_space<vmem>>, vector<1x8x1xf32>
    %32 = vector.shape_cast %31 : vector<1x8x1xf32> to vector<8x1xf32>
    %33 = vector.shape_cast %30 : vector<8x1xf32> to vector<1x8x1xf32>
    tpu.vector_store %arg5[%c0_27, %c0_28, %c0_29], %33 {strides = array<i32>} : memref<1x8x1xf32, #tpu.memory_space<vmem>>, vector<1x8x1xf32>,
    %34 = arith.mulf %25, %25 : vector<8x128xf32>
    %cst_30 = arith.constant dense<0.000000e+00> : vector<8xf32>
    %35 = vector.multi_reduction <add>, %34, %cst_30 [1] : vector<8x128xf32> to vector<8xf32>
    %36 = vector.shape_cast %35 : vector<8xf32> to vector<8x1xf32>
    %c0_31 = arith.constant 0 : index
    %c0_32 = arith.constant 0 : index
    %c0_33 = arith.constant 0 : index
    %37 = vector.load %arg6[%c0_31, %c0_32, %c0_33] : memref<1x8x1xf32, #tpu.memory_space<vmem>>, vector<1x8x1xf32>
    %38 = vector.shape_cast %37 : vector<1x8x1xf32> to vector<8x1xf32>
    %39 = vector.shape_cast %36 : vector<8x1xf32> to vector<1x8x1xf32>
    tpu.vector_store %arg6[%c0_31, %c0_32, %c0_33], %39 {strides = array<i32>} : memref<1x8x1xf32, #tpu.memory_space<vmem>>, vector<1x8x1xf32>,
    return
  }
  func.func @transform_0(%arg0: i32) -> (i32, i32, i32) {
    %c0_i32 = arith.constant 0 : i32
    %c0_i32_0 = arith.constant 0 : i32
    %c0_i32_1 = arith.constant 0 : i32
    return %arg0, %c0_i32, %c0_i32_0 : i32, i32, i32
  }
  func.func @transform_1(%arg0: i32) -> (i32, i32, i32) {
    %c0_i32 = arith.constant 0 : i32
    %c0_i32_0 = arith.constant 0 : i32
    %c0_i32_1 = arith.constant 0 : i32
    %c0_i32_2 = arith.constant 0 : i32
    return %c0_i32, %c0_i32_0, %c0_i32_1 : i32, i32, i32
  }
  func.func @transform_2(%arg0: i32) -> (i32, i32) {
    %c0_i32 = arith.constant 0 : i32
    %c0_i32_0 = arith.constant 0 : i32
    %c0_i32_1 = arith.constant 0 : i32
    return %c0_i32, %c0_i32_0 : i32, i32
  }
  func.func @transform_3(%arg0: i32) -> (i32, i32, i32) {
    %c0_i32 = arith.constant 0 : i32
    %c0_i32_0 = arith.constant 0 : i32
    %c0_i32_1 = arith.constant 0 : i32
    return %arg0, %c0_i32, %c0_i32_0 : i32, i32, i32
  }
  func.func @transform_4(%arg0: i32) -> (i32, i32, i32) {
    %c0_i32 = arith.constant 0 : i32
    %c0_i32_0 = arith.constant 0 : i32
    %c0_i32_1 = arith.constant 0 : i32
    return %arg0, %c0_i32, %c0_i32_0 : i32, i32, i32
  }
  func.func @transform_5(%arg0: i32) -> (i32, i32, i32) {
    %c0_i32 = arith.constant 0 : i32
    %c0_i32_0 = arith.constant 0 : i32
    %c0_i32_1 = arith.constant 0 : i32
    return %arg0, %c0_i32, %c0_i32_0 : i32, i32, i32
  }
}

</mosaic_0001>

<llo_original>
// kernel: tpu_custom_call.1
$region0: #{tpu_custom_call.1}
  #allocation0 [shape = 'u32[]', space=smem, size = 0x4, offset = 0x4, fixed_abs, tag = 'smem constant byte address 0x4 - core index']
  #allocation1 [shape = 'u32[144,128]{1,0:T(1,128)}', space=vmem, size = 0x12000, scoped, tag = 'internal scratch']
  %s0 = inlined_call_operand.hbm [shape: bf16[2,16,256], index: 0, kind: input, shape index: {}]
  %s1 = inlined_call_operand.hbm [shape: bf16[4,8,16], index: 1, kind: input, shape index: {}]
  %s2 = inlined_call_operand.vmem [shape: f32[1,128], index: 2, kind: input, shape index: {}]
  %s3 = inlined_call_operand.hbm [shape: f32[2,8,128], index: 3, kind: output, shape index: {0}]
  %s4 = inlined_call_operand.vmem [shape: f32[2,8,1], index: 4, kind: output, shape index: {1}]
  %s5 = inlined_call_operand.vmem [shape: f32[2,8,1], index: 5, kind: output, shape index: {2}]
  %6 = xla_tuple %s3, %s4, %s5
  %s7 = sld [smem:[#allocation0]]
  $region69: #{tpu_custom_call.1} parent=0
    _
  %s9 = ssub.s32 1, %s7
  %s10 = scalar_select 0, %s9, %s7
  $region1: #{tpu_custom_call.1} parent=0
    #allocation2 [shape = 'u8[16384]{0}', space=vmem, size = 0x4000, scoped, tag = 'input window, operand 0']
    #allocation3 [shape = 's32[2]{0}', space=sflag, size = 0x8, scoped, tag = 'scoped memory for tpu_custom_call.1']
    #allocation4 [shape = 's32[2]{0}', space=sflag, size = 0x8, scoped, tag = 'scoped memory for tpu_custom_call.1']
    #allocation5 [shape = 'u8[8192]{0}', space=vmem, size = 0x2000, scoped, tag = 'input window, operand 1, single buffered']
    #allocation6 [shape = 's32[1]{0}', space=sflag, size = 0x4, scoped, tag = 'scoped memory for tpu_custom_call.1']
    #allocation7 [shape = 'u8[8192]{0}', space=vmem, size = 0x2000, scoped, tag = 'output window, operand 0']
    %11 = vsyncpa [#allocation3], 0
    %s12 = scalar_lea.sflag [#allocation3], 1
    %13 = vsyncpa %s12, 0
    %14 = vsyncpa [#allocation6], 0
    %15 = vsyncpa [#allocation4], 0
    %s16 = scalar_lea.sflag [#allocation4], 1
    %17 = vsyncpa %s16, 0
    loop: start=0, step=1, limit=4
    $region2: #{tpu_custom_call.1} parent=1 // loop_pre_header
      _
    $region3: #{tpu_custom_call.1} parent=1 // loop_header
      %s19 = sphi 0, %s23
      %p20 = scmp.ge.s32.totalorder %s19, 4
      %s29 = sphi 0, %s31
      %s32 = sphi 0, %s29
      %s33 = sphi 0, %s32
      %s49 = sphi 0, %s33
      %s53 = sphi 0, %s53
      %s55 = sphi 0, %s53
      %s56 = sphi 0, %s55
      %s70 = sphi 0, %s56
      %s74 = sphi 0, %s74
      %s76 = sphi 0, %s74
      %s77 = sphi 0, %s76
      %s91 = sphi 0, %s77
      %s97 = sphi 0, %s99
      %s100 = sphi 0, %s97
      %s101 = sphi 0, %s100
      %s117 = sphi 0, %s101
      %s123 = sphi 0, %s125
      %s126 = sphi 0, %s123
      %s127 = sphi 0, %s126
      %s143 = sphi 0, %s127
      %s149 = sphi 0, %s151
      %s152 = sphi 0, %s149
      %s153 = sphi 0, %s152
      %s169 = sphi 0, %s153
    $region4: #{tpu_custom_call.1} parent=1 // loop_header_branch
      %22 = sbr.rel (%p20) target = $region8
    $region5: #{tpu_custom_call.1} parent=1 // loop_body
      %s24 = ssub.s32 %s19, 1
      %s25 = ssub.s32 %s19, 2
      %s26 = sadd.s32 %s19, 1
      %s27 = ssub.s32 %s19, %s26
      %p28 = scmp.eq.s32.totalorder %s27, 0
      %s30 = sadd.s32 %s29, 1
      %s31 = scalar_select %p28, %s29, %s30
      %p34 = pneg %p28
      %p35 = scmp.eq.s32.totalorder %s19, 1
      %p36 = por %p34, %p35
      %p37 = scmp.ne.s32.totalorder %s29, %s32
      %p38 = scmp.eq.s32.totalorder %s19, 0
      %p39 = por %p37, %p38
      %p40 = scmp.ne.s32.totalorder %s29, %s32
      %p41 = scmp.eq.s32.totalorder %s24, 1
      %p42 = por %p40, %p41
      %p43 = scmp.ne.s32.totalorder %s32, %s33
      %p44 = scmp.eq.s32.totalorder %s24, 0
      %p45 = por %p43, %p44
      %p46 = scmp.ne.s32.totalorder %s32, %s33
      %p47 = scmp.eq.s32.totalorder %s25, 1
      %p48 = por %p46, %p47
      %p50 = scmp.ne.s32.totalorder %s33, %s49
      %p51 = scmp.eq.s32.totalorder %s25, 0
      %p52 = por %p50, %p51
      %s54 = sadd.s32 %s53, 1
      %p57 = scmp.eq.s32.totalorder %s19, 1
      %p58 = scmp.ne.s32.totalorder %s53, %s55
      %p59 = scmp.eq.s32.totalorder %s19, 0
      %p60 = por %p58, %p59
      %p61 = scmp.ne.s32.totalorder %s53, %s55
      %p62 = scmp.eq.s32.totalorder %s24, 1
      %p63 = por %p61, %p62
      %p64 = scmp.ne.s32.totalorder %s55, %s56
      %p65 = scmp.eq.s32.totalorder %s24, 0
      %p66 = por %p64, %p65
      %p67 = scmp.ne.s32.totalorder %s55, %s56
      %p68 = scmp.eq.s32.totalorder %s25, 1
      %p69 = por %p67, %p68
      %p71 = scmp.ne.s32.totalorder %s56, %s70
      %p72 = scmp.eq.s32.totalorder %s25, 0
      %p73 = por %p71, %p72
      %s75 = sadd.s32 %s74, 1
      %p78 = scmp.eq.s32.totalorder %s19, 1
      %p79 = scmp.ne.s32.totalorder %s74, %s76
      %p80 = scmp.eq.s32.totalorder %s19, 0
      %p81 = por %p79, %p80
      %p82 = scmp.ne.s32.totalorder %s74, %s76
      %p83 = scmp.eq.s32.totalorder %s24, 1
      %p84 = por %p82, %p83
      %p85 = scmp.ne.s32.totalorder %s76, %s77
      %p86 = scmp.eq.s32.totalorder %s24, 0
      %p87 = por %p85, %p86
      %p88 = scmp.ne.s32.totalorder %s76, %s77
      %p89 = scmp.eq.s32.totalorder %s25, 1
      %p90 = por %p88, %p89
      %p92 = scmp.ne.s32.totalorder %s77, %s91
      %p93 = scmp.eq.s32.totalorder %s25, 0
      %p94 = por %p92, %p93
      %s95 = ssub.s32 %s19, %s26
      %p96 = scmp.eq.s32.totalorder %s95, 0
      %s98 = sadd.s32 %s97, 1
      %s99 = scalar_select %p96, %s97, %s98
      %p102 = pneg %p96
      %p103 = scmp.eq.s32.totalorder %s19, 1
      %p104 = por %p102, %p103
      %p105 = scmp.ne.s32.totalorder %s97, %s100
      %p106 = scmp.eq.s32.totalorder %s19, 0
      %p107 = por %p105, %p106
      %p108 = scmp.ne.s32.totalorder %s97, %s100
      %p109 = scmp.eq.s32.totalorder %s24, 1
      %p110 = por %p108, %p109
      %p111 = scmp.ne.s32.totalorder %s100, %s101
      %p112 = scmp.eq.s32.totalorder %s24, 0
      %p113 = por %p111, %p112
      %p114 = scmp.ne.s32.totalorder %s100, %s101
      %p115 = scmp.eq.s32.totalorder %s25, 1
      %p116 = por %p114, %p115
      %p118 = scmp.ne.s32.totalorder %s101, %s117
      %p119 = scmp.eq.s32.totalorder %s25, 0
      %p120 = por %p118, %p119
      %s121 = ssub.s32 %s19, %s26
      %p122 = scmp.eq.s32.totalorder %s121, 0
      %s124 = sadd.s32 %s123, 1
      %s125 = scalar_select %p122, %s123, %s124
      %p128 = pneg %p122
      %p129 = scmp.eq.s32.totalorder %s19, 1
      %p130 = por %p128, %p129
      %p131 = scmp.ne.s32.totalorder %s123, %s126
      %p132 = scmp.eq.s32.totalorder %s19, 0
      %p133 = por %p131, %p132
      %p134 = scmp.ne.s32.totalorder %s123, %s126
      %p135 = scmp.eq.s32.totalorder %s24, 1
      %p136 = por %p134, %p135
      %p137 = scmp.ne.s32.totalorder %s126, %s127
      %p138 = scmp.eq.s32.totalorder %s24, 0
      %p139 = por %p137, %p138
      %p140 = scmp.ne.s32.totalorder %s126, %s127
      %p141 = scmp.eq.s32.totalorder %s25, 1
      %p142 = por %p140, %p141
      %p144 = scmp.ne.s32.totalorder %s127, %s143
      %p145 = scmp.eq.s32.totalorder %s25, 0
      %p146 = por %p144, %p145
      %s147 = ssub.s32 %s19, %s26
      %p148 = scmp.eq.s32.totalorder %s147, 0
      %s150 = sadd.s32 %s149, 1
      %s151 = scalar_select %p148, %s149, %s150
      %p154 = pneg %p148
      %p155 = scmp.eq.s32.totalorder %s19, 1
      %p156 = por %p154, %p155
      %p157 = scmp.ne.s32.totalorder %s149, %s152
      %p158 = scmp.eq.s32.totalorder %s19, 0
      %p159 = por %p157, %p158
      %p160 = scmp.ne.s32.totalorder %s149, %s152
      %p161 = scmp.eq.s32.totalorder %s24, 1
      %p162 = por %p160, %p161
      %p163 = scmp.ne.s32.totalorder %s152, %s153
      %p164 = scmp.eq.s32.totalorder %s24, 0
      %p165 = por %p163, %p164
      %p166 = scmp.ne.s32.totalorder %s152, %s153
      %p167 = scmp.eq.s32.totalorder %s25, 1
      %p168 = por %p166, %p167
      %p170 = scmp.ne.s32.totalorder %s153, %s169
      %p171 = scmp.eq.s32.totalorder %s25, 0
      %p172 = por %p170, %p171
      %p173 = scmp.le.s32.totalorder 1, %s19
      %p174 = scmp.lt.s32.totalorder %s19, 3
      %p175 = pnand %p173, %p174
      %p176 = pneg %p175
      // Predicated region
      $region9: #{tpu_custom_call.1} parent=5 // pred_check
        _
      $region10: #{tpu_custom_call.1} parent=5 // pred_check_branch
        %178 = sbr.rel (%p175) target = $region12
      $region11: #{tpu_custom_call.1} parent=5 // pred_region
        %s179 = ssub.s32 %s19, 1
        // Predicated region
        $region13: #{tpu_custom_call.1} parent=11 // pred_check
          %p180 = pneg %p66
        $region14: #{tpu_custom_call.1} parent=11 // pred_check_branch
          %182 = sbr.rel (%p180) target = $region16
        $region15: #{tpu_custom_call.1} parent=11 // pred_region
          %s184 = ssub.s32 256, 256
          %185 = vsyncadd [#allocation6], %s184
          %s186 = sshll.u32 [#allocation5], 4
          %s187 = int_to_ptr.vmem [resolvable:$true] %s186
          %192 = dma.hbm_to_vmem [thread:$0]  %s1, 256, %s187, [#allocation6], 64, 64, 4
        $region16: #{tpu_custom_call.1} parent=11 // pred_fallthru
          _
        // Predicated region
        $region17: #{tpu_custom_call.1} parent=11 // pred_check
          %p193 = pneg %p87
        $region18: #{tpu_custom_call.1} parent=11 // pred_check_branch
          %195 = sbr.rel (%p193) target = $region20
        $region19: #{tpu_custom_call.1} parent=11 // pred_region
          _
        $region20: #{tpu_custom_call.1} parent=11 // pred_fallthru
          _
      $region12: #{tpu_custom_call.1} parent=5 // pred_fallthru
        _
      %p196 = scmp.lt.s32.totalorder %s19, 2
      // Predicated region
      $region21: #{tpu_custom_call.1} parent=5 // pred_check
        %p197 = pneg %p196
      $region22: #{tpu_custom_call.1} parent=5 // pred_check_branch
        %199 = sbr.rel (%p197) target = $region24
      $region23: #{tpu_custom_call.1} parent=5 // pred_region
        // Predicated region
        $region25: #{tpu_custom_call.1} parent=23 // pred_check
          %p200 = pneg %p39
        $region26: #{tpu_custom_call.1} parent=23 // pred_check_branch
          %202 = sbr.rel (%p200) target = $region28
        $region27: #{tpu_custom_call.1} parent=23 // pred_region
          %s203 = sand.u32 %s29, 1
          %s204 = scalar_lea.sflag [#allocation3], %s203
          %s205 = sand.u32 %s29, 1
          %s206 = smul.addr %s205, 16
          %s207 = scalar_lea.vmem [#allocation2], %s206
          %s209 = ssub.s32 256, 256
          %210 = vsyncadd %s204, %s209
          %s211 = smul.addr %s19, 4
          %s212 = smul.addr %s211, 64
          %s213 = scalar_lea.hbm %s0, %s212
          %s214 = sshll.u32 %s207, 4
          %s215 = int_to_ptr.vmem [resolvable:$true] %s214
          %220 = dma.hbm_to_vmem [thread:$0]  %s213, 256, %s215, %s204, 128, 128, 8
        $region28: #{tpu_custom_call.1} parent=23 // pred_fallthru
          _
      $region24: #{tpu_custom_call.1} parent=5 // pred_fallthru
        _
      %p221 = scmp.le.s32.totalorder 1, %s19
      %p222 = scmp.lt.s32.totalorder %s19, 3
      %p223 = pnand %p221, %p222
      %p224 = pneg %p223
      // Predicated region
      $region29: #{tpu_custom_call.1} parent=5 // pred_check
        _
      $region30: #{tpu_custom_call.1} parent=5 // pred_check_branch
        %226 = sbr.rel (%p223) target = $region32
      $region31: #{tpu_custom_call.1} parent=5 // pred_region
        %s227 = ssub.s32 %s19, 1
        %s228 = sand.u32 %s32, 1
        %s229 = scalar_lea.sflag [#allocation3], %s228
        %s230 = sand.u32 %s32, 1
        %s231 = smul.addr %s230, 16
        %s232 = scalar_lea.vmem [#allocation2], %s231
        // Predicated region
        $region33: #{tpu_custom_call.1} parent=31 // pred_check
          %p233 = pneg %p45
        $region34: #{tpu_custom_call.1} parent=31 // pred_check_branch
          %235 = sbr.rel (%p233) target = $region36
        $region35: #{tpu_custom_call.1} parent=31 // pred_region
          %236 = dma.done %s229, 256
        $region36: #{tpu_custom_call.1} parent=31 // pred_fallthru
          _
        // Predicated region
        $region37: #{tpu_custom_call.1} parent=31 // pred_check
          %p237 = pneg %p66
        $region38: #{tpu_custom_call.1} parent=31 // pred_check_branch
          %239 = sbr.rel (%p237) target = $region40
        $region39: #{tpu_custom_call.1} parent=31 // pred_region
          %240 = dma.done [#allocation6], 256
        $region40: #{tpu_custom_call.1} parent=31 // pred_fallthru
          _
        %s241 = sand.u32 %s32, 1
        %s242 = scalar_lea.sflag [#allocation3], %s241
        %s243 = sand.u32 %s32, 1
        %s244 = smul.addr %s243, 16
        %s245 = scalar_lea.vmem [#allocation2], %s244
        %p246 = pneg %p45
        %p247 = pneg %p42
        %p248 = pneg %p66
        %p249 = pneg %p63
        %p250 = pneg %p87
        %p251 = pneg %p84
        %p252 = pneg %p113
        %p253 = pneg %p110
        %s254 = sand.u32 %s100, 1
        %s255 = scalar_lea.sflag [#allocation4], %s254
        %s256 = sand.u32 %s100, 1
        %s257 = smul.addr %s256, 8
        %s258 = scalar_lea.vmem [#allocation7], %s257
        %p259 = pneg %p139
        %p260 = pneg %p136
        %p261 = scmp.lt.s32.totalorder %s24, 1
        %s262 = scalar_select %p261, %s24, 1
        %s263 = smul.addr %s262, 8
        %s264 = scalar_lea.vmem %s4, %s263
        %p265 = pneg %p165
        %p266 = pneg %p162
        %p267 = scmp.lt.s32.totalorder %s24, 1
        %s268 = scalar_select %p267, %s24, 1
        %s269 = smul.addr %s268, 8
        %s270 = scalar_lea.vmem %s5, %s269
        %p271 = scmp.lt.s32.totalorder %s24, 1
        %s272 = scalar_select %p271, %s24, 1
        %s273 = smul.addr %s272, 8
        %s274 = scalar_lea.vmem %s4, %s273
        %p275 = scmp.lt.s32.totalorder %s24, 1
        %s276 = scalar_select %p275, %s24, 1
        %s277 = smul.addr %s276, 8
        %s278 = scalar_lea.vmem %s5, %s277
        %v280 = vld [vmem:[%s232] sm:$0xf]
        %v281 = vld [vmem:[%s232 + $0x8] sm:$0xf]
        %v282 = vld [vmem:[#allocation5] sm:$0xf]
        %v283 = vld [vmem:[%s232] sm:$0xff]
        %v284 = vld [vmem:[%s232 + $0x8] sm:$0xff]
        %s285 = scalar_lea.vmem [#allocation5], 4
        %v286 = vld [vmem:[%s285] sm:$0xf]
        %v289 = vunpack.c.l.b16 %v283
        %v290 = vunpack.c.h.b16 %v283
        %v291 = vunpack.c.l.b16 %v284
        %v292 = vunpack.c.h.b16 %v284
        %v293 = vpack.c.b16 %v291, %v289
        %v294 = vpack.c.b16 %v292, %v290
        %295 = vrot.lane.b32.xlu0 %v293, 127
        %v296 = vpop.permute.xlu0 %295
        %297 = vrot.lane.b32.xlu0 %v294, 127
        %v298 = vpop.permute.xlu0 %297
        %vm299 = vcmask 1039360
        %v300 = vsel %vm299, %v296, %v298
        %vm302 = vcmask 130048
        %v304 = vsel %vm302, %v286, 0
        %306 = vmatprep.subr.bf16.mxu0 0
        %307 = vmatpush1.bf16.msra.mxu0 %v300
        %308 = vmatprep.subr.bf16.mxu0 0
        %309 = vmatpush1.bf16.msra.mxu0 0
        %310 = vmatprep.subr.bf16.mxu0 0
        %311 = vmatpush1.bf16.msra.mxu0 0
        %312 = vmatprep.subr.bf16.mxu0 0
        %313 = vmatpush1.bf16.msra.mxu0 0
        %314 = vmatprep.subr.bf16.mxu0 0
        %315 = vmatpush1.bf16.msra.mxu0 0
        %316 = vmatprep.subr.bf16.mxu0 0
        %317 = vmatpush1.bf16.msra.mxu0 0
        %318 = vmatprep.subr.bf16.mxu0 0
        %319 = vmatpush1.bf16.msra.mxu0 0
        %320 = vmatprep.subr.bf16.mxu0 0
        %321 = vmatpush1.bf16.msra.mxu0 0
        %322 = vmatprep.subr.bf16.mxu0 0
        %323 = vmatpush1.bf16.msra.mxu0 0
        %324 = vmatprep.subr.bf16.mxu0 0
        %325 = vmatpush1.bf16.msra.mxu0 0
        %326 = vmatprep.subr.bf16.mxu0 0
        %327 = vmatpush1.bf16.msra.mxu0 0
        %328 = vmatprep.subr.bf16.mxu0 0
        %329 = vmatpush1.bf16.msra.mxu0 0
        %330 = vmatprep.subr.bf16.mxu0 0
        %331 = vmatpush1.bf16.msra.mxu0 0
        %332 = vmatprep.subr.bf16.mxu0 0
        %333 = vmatpush1.bf16.msra.mxu0 0
        %334 = vmatprep.subr.bf16.mxu0 0
        %335 = vmatpush1.bf16.msra.mxu0 0
        %336 = vmatprep.subr.bf16.mxu0 0
        %337 = vmatpush1.bf16.msra.mxu0 0
        %338 = vmatprep.mubr.bf16.mxu0 0
        %339 = vmatmul.mubr.bf16.gmra.mrb[0].mxu0 %v304
        %v340 = vpop.f32.mrb[0].mxu0
        %v341 = vadd.f32 0.0, %v340
        %v342 = vpop.f32.mrb[0].mxu0
        %v343 = vpop.f32.mrb[0].mxu0
        %v344 = vpop.f32.mrb[0].mxu0
        %345 = vdwg.mxu0
        %v348 = vunpack.c.l.b16 %v280
        %v349 = vunpack.c.l.b16 %v281
        %v350 = vpack.c.b16 %v349, %v348
        %v353 = vsel %vm302, %v282, 0
        %355 = vmatprep.subr.bf16.mxu0 0
        %356 = vmatpush1.bf16.msra.mxu0 %v350
        %357 = vmatprep.subr.bf16.mxu0 0
        %358 = vmatpush1.bf16.msra.mxu0 0
        %359 = vmatprep.subr.bf16.mxu0 0
        %360 = vmatpush1.bf16.msra.mxu0 0
        %361 = vmatprep.subr.bf16.mxu0 0
        %362 = vmatpush1.bf16.msra.mxu0 0
        %363 = vmatprep.subr.bf16.mxu0 0
        %364 = vmatpush1.bf16.msra.mxu0 0
        %365 = vmatprep.subr.bf16.mxu0 0
        %366 = vmatpush1.bf16.msra.mxu0 0
        %367 = vmatprep.subr.bf16.mxu0 0
        %368 = vmatpush1.bf16.msra.mxu0 0
        %369 = vmatprep.subr.bf16.mxu0 0
        %370 = vmatpush1.bf16.msra.mxu0 0
        %371 = vmatprep.subr.bf16.mxu0 0
        %372 = vmatpush1.bf16.msra.mxu0 0
        %373 = vmatprep.subr.bf16.mxu0 0
        %374 = vmatpush1.bf16.msra.mxu0 0
        %375 = vmatprep.subr.bf16.mxu0 0
        %376 = vmatpush1.bf16.msra.mxu0 0
        %377 = vmatprep.subr.bf16.mxu0 0
        %378 = vmatpush1.bf16.msra.mxu0 0
        %379 = vmatprep.subr.bf16.mxu0 0
        %380 = vmatpush1.bf16.msra.mxu0 0
        %381 = vmatprep.subr.bf16.mxu0 0
        %382 = vmatpush1.bf16.msra.mxu0 0
        %383 = vmatprep.subr.bf16.mxu0 0
        %384 = vmatpush1.bf16.msra.mxu0 0
        %385 = vmatprep.subr.bf16.mxu0 0
        %386 = vmatpush1.bf16.msra.mxu0 0
        %387 = vmatprep.mubr.bf16.mxu0 0
        %388 = vmatmul.mubr.bf16.gmra.mrb[0].mxu0 %v353
        %v389 = vpop.f32.mrb[0].mxu0
        %v390 = vadd.f32 %v341, %v389
        %v391 = vpop.f32.mrb[0].mxu0
        %v392 = vpop.f32.mrb[0].mxu0
        %v393 = vpop.f32.mrb[0].mxu0
        %394 = vdwg.mxu0
        %s395 = scalar_lea.vmem [#allocation5], 8
        %v396 = vld [vmem:[%s395] sm:$0xf]
        %397 = vrot.lane.b32.xlu0 %v293, 119
        %v398 = vpop.permute.xlu0 %397
        %399 = vrot.lane.b32.xlu0 %v294, 119
        %v400 = vpop.permute.xlu0 %399
        %vm401 = vcmask 973824
        %v402 = vsel %vm401, %v398, %v400
        %v405 = vsel %vm302, %v396, 0
        %407 = vmatprep.subr.bf16.mxu0 0
        %408 = vmatpush1.bf16.msra.mxu0 %v402
        %409 = vmatprep.subr.bf16.mxu0 0
        %410 = vmatpush1.bf16.msra.mxu0 0
        %411 = vmatprep.subr.bf16.mxu0 0
        %412 = vmatpush1.bf16.msra.mxu0 0
        %413 = vmatprep.subr.bf16.mxu0 0
        %414 = vmatpush1.bf16.msra.mxu0 0
        %415 = vmatprep.subr.bf16.mxu0 0
        %416 = vmatpush1.bf16.msra.mxu0 0
        %417 = vmatprep.subr.bf16.mxu0 0
        %418 = vmatpush1.bf16.msra.mxu0 0
        %419 = vmatprep.subr.bf16.mxu0 0
        %420 = vmatpush1.bf16.msra.mxu0 0
        %421 = vmatprep.subr.bf16.mxu0 0
        %422 = vmatpush1.bf16.msra.mxu0 0
        %423 = vmatprep.subr.bf16.mxu0 0
        %424 = vmatpush1.bf16.msra.mxu0 0
        %425 = vmatprep.subr.bf16.mxu0 0
        %426 = vmatpush1.bf16.msra.mxu0 0
        %427 = vmatprep.subr.bf16.mxu0 0
        %428 = vmatpush1.bf16.msra.mxu0 0
        %429 = vmatprep.subr.bf16.mxu0 0
        %430 = vmatpush1.bf16.msra.mxu0 0
        %431 = vmatprep.subr.bf16.mxu0 0
        %432 = vmatpush1.bf16.msra.mxu0 0
        %433 = vmatprep.subr.bf16.mxu0 0
        %434 = vmatpush1.bf16.msra.mxu0 0
        %435 = vmatprep.subr.bf16.mxu0 0
        %436 = vmatpush1.bf16.msra.mxu0 0
        %437 = vmatprep.subr.bf16.mxu0 0
        %438 = vmatpush1.bf16.msra.mxu0 0
        %439 = vmatprep.mubr.bf16.mxu0 0
        %440 = vmatmul.mubr.bf16.gmra.mrb[0].mxu0 %v405
        %v441 = vpop.f32.mrb[0].mxu0
        %v442 = vadd.f32 0.0, %v441
        %v443 = vpop.f32.mrb[0].mxu0
        %v444 = vpop.f32.mrb[0].mxu0
        %v445 = vpop.f32.mrb[0].mxu0
        %446 = vdwg.mxu0
        %v447 = vadd.f32 %v390, %v442
        %s448 = scalar_lea.vmem [#allocation5], 12
        %v449 = vld [vmem:[%s448] sm:$0xf]
        %450 = vrot.lane.b32.xlu0 %v293, 118
        %v451 = vpop.permute.xlu0 %450
        %452 = vrot.lane.b32.xlu0 %v294, 118
        %v453 = vpop.permute.xlu0 %452
        %vm454 = vcmask 965632
        %v455 = vsel %vm454, %v451, %v453
        %v458 = vsel %vm302, %v449, 0
        %460 = vmatprep.subr.bf16.mxu0 0
        %461 = vmatpush1.bf16.msra.mxu0 %v455
        %462 = vmatprep.subr.bf16.mxu0 0
        %463 = vmatpush1.bf16.msra.mxu0 0
        %464 = vmatprep.subr.bf16.mxu0 0
        %465 = vmatpush1.bf16.msra.mxu0 0
        %466 = vmatprep.subr.bf16.mxu0 0
        %467 = vmatpush1.bf16.msra.mxu0 0
        %468 = vmatprep.subr.bf16.mxu0 0
        %469 = vmatpush1.bf16.msra.mxu0 0
        %470 = vmatprep.subr.bf16.mxu0 0
        %471 = vmatpush1.bf16.msra.mxu0 0
        %472 = vmatprep.subr.bf16.mxu0 0
        %473 = vmatpush1.bf16.msra.mxu0 0
        %474 = vmatprep.subr.bf16.mxu0 0
        %475 = vmatpush1.bf16.msra.mxu0 0
        %476 = vmatprep.subr.bf16.mxu0 0
        %477 = vmatpush1.bf16.msra.mxu0 0
        %478 = vmatprep.subr.bf16.mxu0 0
        %479 = vmatpush1.bf16.msra.mxu0 0
        %480 = vmatprep.subr.bf16.mxu0 0
        %481 = vmatpush1.bf16.msra.mxu0 0
        %482 = vmatprep.subr.bf16.mxu0 0
        %483 = vmatpush1.bf16.msra.mxu0 0
        %484 = vmatprep.subr.bf16.mxu0 0
        %485 = vmatpush1.bf16.msra.mxu0 0
        %486 = vmatprep.subr.bf16.mxu0 0
        %487 = vmatpush1.bf16.msra.mxu0 0
        %488 = vmatprep.subr.bf16.mxu0 0
        %489 = vmatpush1.bf16.msra.mxu0 0
        %490 = vmatprep.subr.bf16.mxu0 0
        %491 = vmatpush1.bf16.msra.mxu0 0
        %492 = vmatprep.mubr.bf16.mxu0 0
        %493 = vmatmul.mubr.bf16.gmra.mrb[0].mxu0 %v458
        %v494 = vpop.f32.mrb[0].mxu0
        %v495 = vadd.f32 0.0, %v494
        %v496 = vpop.f32.mrb[0].mxu0
        %v497 = vpop.f32.mrb[0].mxu0
        %v498 = vpop.f32.mrb[0].mxu0
        %499 = vdwg.mxu0
        %v500 = vadd.f32 %v447, %v495
        %v501 = vld [vmem:[%s2] sm:$0x1]
        %v503 = vlaneseq
        %v504 = vshrl.u32 %v503, 7
        %v505 = vsub.s32 0, %v504
        %v506 = vrot.slane %v501, %v505
        %v508 = vmul.f32 %v500, %v506
        %509 = vst [vmem:[%s258] sm:$0xff] %v508
        %510 = vadd.xlane.f32.xlu0 %v508
        %v511 = vpop.xlane.xlu0 %510
        %vm512 = vcmask 7168
        %513 = vst.msk [vmem:[%s274] sm:$0xff] %vm512, %v511
        %v514 = vmul.f32 %v508, %v508
        %515 = vadd.xlane.f32.xlu0 %v514
        %v516 = vpop.xlane.xlu0 %515
        %517 = vst.msk [vmem:[%s278] sm:$0xff] %vm512, %v516
        %s518 = sand.u32 %s100, 1
        %s519 = scalar_lea.sflag [#allocation4], %s518
        %s520 = sand.u32 %s100, 1
        %s521 = smul.addr %s520, 8
        %s522 = scalar_lea.vmem [#allocation7], %s521
        %p523 = scmp.lt.s32.totalorder %s24, 1
        %s524 = scalar_select %p523, %s24, 1
        %s525 = smul.addr %s524, 8
        %s526 = scalar_lea.vmem %s4, %s525
        %p527 = scmp.lt.s32.totalorder %s24, 1
        %s528 = scalar_select %p527, %s24, 1
        %s529 = smul.addr %s528, 8
        %s530 = scalar_lea.vmem %s5, %s529
        // Predicated region
        $region41: #{tpu_custom_call.1} parent=31 // pred_check
          %p531 = pneg %p110
        $region42: #{tpu_custom_call.1} parent=31 // pred_check_branch
          %533 = sbr.rel (%p531) target = $region44
        $region43: #{tpu_custom_call.1} parent=31 // pred_region
          %s535 = ssub.s32 128, 128
          %536 = vsyncadd %s519, %s535
          %s537 = smul.addr %s24, 128
          %s538 = scalar_lea.hbm %s3, %s537
          %s540 = sshll.u32 %s522, 4
          %s541 = int_to_ptr.vmem [resolvable:$true] %s540
          %543 = dma.vmem_to_hbm [thread:$0]  %s541, 128, %s538, %s519
        $region44: #{tpu_custom_call.1} parent=31 // pred_fallthru
          _
        // Predicated region
        $region45: #{tpu_custom_call.1} parent=31 // pred_check
          %p544 = pneg %p136
        $region46: #{tpu_custom_call.1} parent=31 // pred_check_branch
          %546 = sbr.rel (%p544) target = $region48
        $region47: #{tpu_custom_call.1} parent=31 // pred_region
          _
        $region48: #{tpu_custom_call.1} parent=31 // pred_fallthru
          _
        // Predicated region
        $region49: #{tpu_custom_call.1} parent=31 // pred_check
          %p547 = pneg %p162
        $region50: #{tpu_custom_call.1} parent=31 // pred_check_branch
          %549 = sbr.rel (%p547) target = $region52
        $region51: #{tpu_custom_call.1} parent=31 // pred_region
          _
        $region52: #{tpu_custom_call.1} parent=31 // pred_fallthru
          _
      $region32: #{tpu_custom_call.1} parent=5 // pred_fallthru
        _
      %p550 = scmp.le.s32.totalorder 2, %s19
      // Predicated region
      $region53: #{tpu_custom_call.1} parent=5 // pred_check
        %p551 = pneg %p550
      $region54: #{tpu_custom_call.1} parent=5 // pred_check_branch
        %553 = sbr.rel (%p551) target = $region56
      $region55: #{tpu_custom_call.1} parent=5 // pred_region
        %s554 = ssub.s32 %s19, 2
        // Predicated region
        $region57: #{tpu_custom_call.1} parent=55 // pred_check
          %p555 = pneg %p116
        $region58: #{tpu_custom_call.1} parent=55 // pred_check_branch
          %557 = sbr.rel (%p555) target = $region60
        $region59: #{tpu_custom_call.1} parent=55 // pred_region
          %s558 = sand.u32 %s101, 1
          %s559 = scalar_lea.sflag [#allocation4], %s558
          %s560 = sand.u32 %s101, 1
          %s561 = smul.addr %s560, 8
          %s562 = scalar_lea.vmem [#allocation7], %s561
          %563 = dma.done %s559, 128
        $region60: #{tpu_custom_call.1} parent=55 // pred_fallthru
          _
        // Predicated region
        $region61: #{tpu_custom_call.1} parent=55 // pred_check
          %p564 = pneg %p142
        $region62: #{tpu_custom_call.1} parent=55 // pred_check_branch
          %566 = sbr.rel (%p564) target = $region64
        $region63: #{tpu_custom_call.1} parent=55 // pred_region
          %p567 = scmp.lt.s32.totalorder %s25, 1
          %s568 = scalar_select %p567, %s25, 1
          %s569 = smul.addr %s568, 8
          %s570 = scalar_lea.vmem %s4, %s569
        $region64: #{tpu_custom_call.1} parent=55 // pred_fallthru
          _
        // Predicated region
        $region65: #{tpu_custom_call.1} parent=55 // pred_check
          %p571 = pneg %p168
        $region66: #{tpu_custom_call.1} parent=55 // pred_check_branch
          %573 = sbr.rel (%p571) target = $region68
        $region67: #{tpu_custom_call.1} parent=55 // pred_region
          %p574 = scmp.lt.s32.totalorder %s25, 1
          %s575 = scalar_select %p574, %s25, 1
          %s576 = smul.addr %s575, 8
          %s577 = scalar_lea.vmem %s5, %s576
        $region68: #{tpu_custom_call.1} parent=55 // pred_fallthru
          _
      $region56: #{tpu_custom_call.1} parent=5 // pred_fallthru
        _
    $region6: #{tpu_custom_call.1} parent=1 // loop_footer
      %s23 = sadd.s32 1, %s19
    $region7: #{tpu_custom_call.1} parent=1 // loop_footer_branch
      %18 = sbr.rel target = $region3
    $region8: #{tpu_custom_call.1} parent=1 // loop_exit
      _
    %578 = vsyncpa [#allocation3], 1
    %s579 = scalar_lea.sflag [#allocation3], 1
    %580 = vsyncpa %s579, 1
    %581 = vsyncpa [#allocation6], 1
    %582 = vsyncpa [#allocation4], 1
    %s583 = scalar_lea.sflag [#allocation4], 1
    %584 = vsyncpa %s583, 1

</llo_original>
